<compile_context>
chip_gen: v6e
topology: v6e:2x2x1
jax: 0.10.0
libtpu: 0.0.40
codegen_flags: <defaults>
</compile_context>

<pallas_src>
import math
from functools import partial

import jax
import jax.numpy as jnp
from jax.experimental import pallas as pl
from jax.experimental.pallas import tpu as pltpu


# ------------------------------- helpers ------------------------------------

def _row_tile(M, target=512):
    """Largest row tile <= target that divides M and is a multiple of 8 (sublane)."""
    if M <= target:
        return M
    start = target - (target % 8)
    for tm in range(start, 7, -8):
        if M % tm == 0:
            return tm
    return M  # fallback: single whole-array block


def _rmsnorm_f32(x, g):
    # x-transformers RMSNorm: F.normalize(x, dim=-1) * sqrt(dim) * g   (eps = 1e-12)
    d = x.shape[-1]
    nrm = jnp.maximum(jnp.sqrt(jnp.sum(x * x, axis=-1, keepdims=True)), 1e-12)
    return x / nrm * (float(d) ** 0.5) * g


def rotary_tables(seq_len, rot_dim, theta=10000.0):
    """cos table and sign-folded sin table so rope(t) = t*cos + rotate_half_u(t)*sin_signed."""
    inv_freq = 1.0 / (theta ** (jnp.arange(0, rot_dim, 2, dtype=jnp.float32) / rot_dim))
    t = jnp.arange(seq_len, dtype=jnp.float32)
    freqs = jnp.einsum("i,j->ij", t, inv_freq)
    freqs = jnp.concatenate([freqs, freqs], axis=-1)          # (S, rot_dim)
    cos = jnp.cos(freqs)
    sin = jnp.sin(freqs)
    half = rot_dim // 2
    sign = jnp.concatenate([-jnp.ones((half,), jnp.float32),
                            jnp.ones((rot_dim - half,), jnp.float32)])
    return cos, sin * sign


# ----------------------------- Pallas kernels -------------------------------

def _norm_qkv_kernel(x_ref, g_ref, wq_ref, wk_ref, wv_ref, q_ref, k_ref, v_ref):
    # Fused pre-attention RMSNorm + the three bias-free projections (one launch).
    x = x_ref[...].astype(jnp.float32)
    normed = _rmsnorm_f32(x, g_ref[...].astype(jnp.float32))
    q_ref[...] = jnp.dot(normed, wq_ref[...].astype(jnp.float32),
                         preferred_element_type=jnp.float32).astype(q_ref.dtype)
    k_ref[...] = jnp.dot(normed, wk_ref[...].astype(jnp.float32),
                         preferred_element_type=jnp.float32).astype(k_ref.dtype)
    v_ref[...] = jnp.dot(normed, wv_ref[...].astype(jnp.float32),
                         preferred_element_type=jnp.float32).astype(v_ref.dtype)


def norm_qkv(x2d, g, wq, wk, wv, tm):
    M, D = x2d.shape
    inner = wq.shape[1]
    spec_x = pl.BlockSpec((tm, D), lambda i: (i, 0))
    spec_g = pl.BlockSpec((1, D), lambda i: (0, 0))
    spec_w = pl.BlockSpec((D, inner), lambda i: (0, 0))
    spec_o = pl.BlockSpec((tm, inner), lambda i: (i, 0))
    return pl.pallas_call(
        _norm_qkv_kernel,
        out_shape=(jax.ShapeDtypeStruct((M, inner), x2d.dtype),) * 3,
        grid=(M // tm,),
        in_specs=[spec_x, spec_g, spec_w, spec_w, spec_w],
        out_specs=(spec_o, spec_o, spec_o),
        compiler_params=pltpu.CompilerParams(dimension_semantics=("parallel",)),
    )(x2d, g.reshape(1, D), wq, wk, wv)


def _attn_kernel(q_ref, k_ref, v_ref, cos_ref, sin_ref, o_ref, *, heads, scale):
    # One batch element per grid step; all heads processed per step so the
    # output store is a single lane-dense (S, H*Dh) write.
    q_all = q_ref[0].astype(jnp.float32)          # (S, H*Dh)
    k_all = k_ref[0].astype(jnp.float32)
    v_all = v_ref[0].astype(jnp.float32)
    cos = cos_ref[...].astype(jnp.float32)        # (S, Dh)
    sin = sin_ref[...].astype(jnp.float32)        # sign-folded sin
    inner = q_all.shape[-1]
    dh = inner // heads
    half = dh // 2

    def rotate_half_u(t):                         # unsigned rotate-half: [t2, t1]
        if dh % 128 == 0:
            return pltpu.roll(t, shift=half, axis=1)   # XLU lane rotation
        # narrow head-dim fallback (lane width < 128): static slices + concat
        return jnp.concatenate([t[:, half:], t[:, :half]], axis=1)

    def rope(t):                                  # t*cos + rotate_half(t)*sin
        return t * cos + rotate_half_u(t) * sin

    outs = []
    for hd in range(heads):                       # static unroll; all inside one grid step
        lo = hd * dh
        q = rope(q_all[:, lo:lo + dh])
        k = rope(k_all[:, lo:lo + dh])
        v = v_all[:, lo:lo + dh]
        s = jax.lax.dot_general(q, k, (((1,), (1,)), ((), ())),
                                preferred_element_type=jnp.float32) * scale
        s = s - jnp.max(s, axis=-1, keepdims=True)
        p = jnp.exp(s)
        p = p / jnp.sum(p, axis=-1, keepdims=True)
        outs.append(jnp.dot(p, v, preferred_element_type=jnp.float32))
    o_ref[0] = jnp.concatenate(outs, axis=-1).astype(o_ref.dtype)
    # TODO(synk): flash-style KV tiling (online softmax) for long sequences;
    # full SxS scores are materialized per head here.


def attention(q, k, v, cos, sin_signed, heads, scale):
    B, S, inner = q.shape
    rot = cos.shape[-1]
    spec_x = pl.BlockSpec((1, S, inner), lambda b: (b, 0, 0))
    spec_t = pl.BlockSpec((S, rot), lambda b: (0, 0))
    return pl.pallas_call(
        partial(_attn_kernel, heads=heads, scale=scale),
        out_shape=jax.ShapeDtypeStruct((B, S, inner), q.dtype),
        grid=(B,),
        in_specs=[spec_x, spec_x, spec_x, spec_t, spec_t],
        out_specs=spec_x,
        compiler_params=pltpu.CompilerParams(dimension_semantics=("parallel",)),
    )(q, k, v, cos, sin_signed)


def _proj_residual_kernel(a_ref, w_ref, res_ref, o_ref):
    # attention output projection (bias-free) with the residual add folded in
    acc = jnp.dot(a_ref[...].astype(jnp.float32), w_ref[...].astype(jnp.float32),
                  preferred_element_type=jnp.float32)
    o_ref[...] = (acc + res_ref[...].astype(jnp.float32)).astype(o_ref.dtype)


def proj_residual(a2d, w, res2d, tm):
    M, K = a2d.shape
    N = w.shape[1]
    return pl.pallas_call(
        _proj_residual_kernel,
        out_shape=jax.ShapeDtypeStruct((M, N), res2d.dtype),
        grid=(M // tm,),
        in_specs=[pl.BlockSpec((tm, K), lambda i: (i, 0)),
                  pl.BlockSpec((K, N), lambda i: (0, 0)),
                  pl.BlockSpec((tm, N), lambda i: (i, 0))],
        out_specs=pl.BlockSpec((tm, N), lambda i: (i, 0)),
        compiler_params=pltpu.CompilerParams(dimension_semantics=("parallel",)),
    )(a2d, w, res2d)


def _norm_ff_residual_kernel(x_ref, g_ref, w1_ref, b1_ref, w2_ref, b2_ref, o_ref):
    # Fused pre-FF RMSNorm + Linear/GELU/Linear + residual add.
    x = x_ref[...].astype(jnp.float32)
    normed = _rmsnorm_f32(x, g_ref[...].astype(jnp.float32))
    h = jnp.dot(normed, w1_ref[...].astype(jnp.float32),
                preferred_element_type=jnp.float32) + b1_ref[...].astype(jnp.float32)
    h = jax.nn.gelu(h, approximate=False)          # nn.GELU() exact (erf)
    y = jnp.dot(h, w2_ref[...].astype(jnp.float32),
                preferred_element_type=jnp.float32) + b2_ref[...].astype(jnp.float32)
    o_ref[...] = (y + x).astype(o_ref.dtype)       # residual folded in


def norm_ff_residual(x2d, g, w1, b1, w2, b2, tm):
    M, D = x2d.shape
    H = w1.shape[1]
    return pl.pallas_call(
        _norm_ff_residual_kernel,
        out_shape=jax.ShapeDtypeStruct((M, D), x2d.dtype),
        grid=(M // tm,),
        in_specs=[pl.BlockSpec((tm, D), lambda i: (i, 0)),
                  pl.BlockSpec((1, D), lambda i: (0, 0)),
                  pl.BlockSpec((D, H), lambda i: (0, 0)),
                  pl.BlockSpec((1, H), lambda i: (0, 0)),
                  pl.BlockSpec((H, D), lambda i: (0, 0)),
                  pl.BlockSpec((1, D), lambda i: (0, 0))],
        out_specs=pl.BlockSpec((tm, D), lambda i: (i, 0)),
        compiler_params=pltpu.CompilerParams(dimension_semantics=("parallel",)),
    )(x2d, g.reshape(1, D), w1, b1.reshape(1, H), w2, b2.reshape(1, D))


def _final_head_kernel(x_ref, g_ref, w_ref, b_ref, o_ref):
    # Fused final RMSNorm + Reduce('b n d -> b d', 'mean') + Linear(dim, 1)
    x = x_ref[0].astype(jnp.float32)               # (S, D)
    normed = _rmsnorm_f32(x, g_ref[...].astype(jnp.float32))
    pooled = jnp.mean(normed, axis=0, keepdims=True)   # (1, D)
    out = jnp.dot(pooled, w_ref[...].astype(jnp.float32),
                  preferred_element_type=jnp.float32) + b_ref[...].astype(jnp.float32)
    o_ref[0] = out.astype(o_ref.dtype)             # (1, 1)


def final_head(x, g, w, b):
    B, S, D = x.shape
    out = pl.pallas_call(
        _final_head_kernel,
        out_shape=jax.ShapeDtypeStruct((B, 1, 1), x.dtype),
        grid=(B,),
        in_specs=[pl.BlockSpec((1, S, D), lambda i: (i, 0, 0)),
                  pl.BlockSpec((1, D), lambda i: (0, 0)),
                  pl.BlockSpec((D, 1), lambda i: (0, 0)),
                  pl.BlockSpec((1, 1), lambda i: (0, 0))],
        out_specs=pl.BlockSpec((1, 1, 1), lambda i: (i, 0, 0)),
        compiler_params=pltpu.CompilerParams(dimension_semantics=("parallel",)),
    )(x, g.reshape(1, D), w, b.reshape(1, 1))
    return out[:, 0, 0]


# ------------------------------- glue / model -------------------------------

def init_params(key, num_tokens, dim, dim_head, heads, depth, ff_mult=4):
    inner = dim_head * heads
    hidden = dim * ff_mult
    keys = iter(jax.random.split(key, 6 * depth + 2))

    def w(shape, scale=0.02):
        return jax.random.normal(next(keys), shape, jnp.float32) * scale

    layers = []
    for _ in range(depth):
        layers.append(dict(
            attn_norm_g=jnp.ones((dim,), jnp.float32),
            wq=w((dim, inner)), wk=w((dim, inner)), wv=w((dim, inner)),
            wo=w((inner, dim)),
            ff_norm_g=jnp.ones((dim,), jnp.float32),
            ff_w1=w((dim, hidden)), ff_b1=jnp.zeros((hidden,), jnp.float32),
            ff_w2=w((hidden, dim)), ff_b2=jnp.zeros((dim,), jnp.float32),
        ))
    return dict(
        token_emb=w((num_tokens, dim)),
        layers=layers,
        final_norm_g=jnp.ones((dim,), jnp.float32),
        head_w=w((dim, 1)),
        head_b=jnp.zeros((1,), jnp.float32),
        config=dict(dim=dim, heads=heads, dim_head=dim_head, depth=depth),
    )


def discriminator_forward(params, x):
    """x: int token ids (B, S) (or float embeddings (B, S, D)). Returns logit (B,).
    TODO(synk): gradient_penalty branch (return_gradient_penalty=True) needs
    autodiff (custom_vjp) through the Pallas kernels; forward-only here."""
    cfg = params["config"]
    D, H, Dh = cfg["dim"], cfg["heads"], cfg["dim_head"]
    inner = H * Dh

    if jnp.issubdtype(x.dtype, jnp.integer):
        h = jnp.take(params["token_emb"], x, axis=0)   # embedding gather (JAX glue)
    else:
        h = x
    B, S = h.shape[0], h.shape[1]

    rot_dim = max(Dh // 2, 32)   # x-transformers default rotary dim
    assert rot_dim == Dh, \
        "TODO(synk): partial rotary (rot_dim < dim_head) not implemented in-kernel"
    cos, sin_signed = rotary_tables(S, rot_dim)
    scale = Dh ** -0.5

    M = B * S
    tm = _row_tile(M)
    h2d = h.reshape(M, D)

    for layer in params["layers"]:
        # 1) fused RMSNorm + Q/K/V projection (single launch, no zero biases)
        q, k, v = norm_qkv(h2d, layer["attn_norm_g"],
                           layer["wq"], layer["wk"], layer["wv"], tm)
        # 2) attention: grid over batch, all heads per grid step, RoPE in-kernel,
        #    lane-dense (S, H*Dh) output; no head transposes in XLA glue.
        o = attention(q.reshape(B, S, inner), k.reshape(B, S, inner),
                      v.reshape(B, S, inner), cos, sin_signed, H, scale)
        # 3a) fused output projection + residual add
        h2d = proj_residual(o.reshape(M, inner), layer["wo"], h2d, tm)
        # 3b) fused RMSNorm + FF(GELU) + residual add
        h2d = norm_ff_residual(h2d, layer["ff_norm_g"],
                               layer["ff_w1"], layer["ff_b1"],
                               layer["ff_w2"], layer["ff_b2"], tm)

    # fused final RMSNorm + mean-pool over sequence + Linear(dim, 1) + squeeze
    return final_head(h2d.reshape(B, S, D), params["final_norm_g"],
                      params["head_w"], params["head_b"])


if __name__ == "__main__":
    num_tokens, dim, dim_head, heads, max_seq_len, depth = 256, 64, 32, 2, 8, 2
    key = jax.random.PRNGKey(0)
    pkey, xkey = jax.random.split(key)
    params = init_params(pkey, num_tokens, dim, dim_head, heads, depth)
    x = jax.random.randint(xkey, (2, max_seq_len), 0, num_tokens, dtype=jnp.int32)

    logits = discriminator_forward(params, x)
    jax.block_until_ready(logits)
    assert logits.shape == (2,) and logits.dtype == jnp.float32
    print("KERNEL_OK")
</pallas_src>

<mosaic_0001>
module attributes {stable_mosaic.version = 11 : i64} {
  func.func @_norm_qkv_kernel(%arg0: i32, %arg1: memref<16x64xf32, #tpu.memory_space<vmem>>, %arg2: memref<1x64xf32, #tpu.memory_space<vmem>>, %arg3: memref<64x64xf32, #tpu.memory_space<vmem>>, %arg4: memref<64x64xf32, #tpu.memory_space<vmem>>, %arg5: memref<64x64xf32, #tpu.memory_space<vmem>>, %arg6: memref<16x64xf32, #tpu.memory_space<vmem>>, %arg7: memref<16x64xf32, #tpu.memory_space<vmem>>, %arg8: memref<16x64xf32, #tpu.memory_space<vmem>>) attributes {dimension_semantics = [#tpu.dimension_semantics<parallel>], iteration_bounds = array<i64: 1>, scalar_prefetch = 0 : i64, scratch_operands = 0 : i64, tpu.core_type = #tpu.core_type<tc>, window_params = [{transform_indices = @transform_0, window_bounds = array<i64: 16, 64>}, {pipeline_mode = #tpu.pipeline_mode<synchronous>, transform_indices = @transform_1, window_bounds = array<i64: 1, 64>}, {pipeline_mode = #tpu.pipeline_mode<synchronous>, transform_indices = @transform_2, window_bounds = array<i64: 64, 64>}, {pipeline_mode = #tpu.pipeline_mode<synchronous>, transform_indices = @transform_3, window_bounds = array<i64: 64, 64>}, {pipeline_mode = #tpu.pipeline_mode<synchronous>, transform_indices = @transform_4, window_bounds = array<i64: 64, 64>}, {transform_indices = @transform_5, window_bounds = array<i64: 16, 64>}, {transform_indices = @transform_6, window_bounds = array<i64: 16, 64>}, {transform_indices = @transform_7, window_bounds = array<i64: 16, 64>}]} {
    %c0 = arith.constant 0 : index
    %c0_0 = arith.constant 0 : index
    %0 = vector.load %arg1[%c0, %c0_0] : memref<16x64xf32, #tpu.memory_space<vmem>>, vector<16x64xf32>
    %c0_1 = arith.constant 0 : index
    %c0_2 = arith.constant 0 : index
    %1 = vector.load %arg2[%c0_1, %c0_2] : memref<1x64xf32, #tpu.memory_space<vmem>>, vector<1x64xf32>
    %2 = arith.mulf %0, %0 : vector<16x64xf32>
    %cst = arith.constant dense<0.000000e+00> : vector<16xf32>
    %3 = vector.multi_reduction <add>, %2, %cst [1] : vector<16x64xf32> to vector<16xf32>
    %4 = vector.shape_cast %3 : vector<16xf32> to vector<16x1xf32>
    %5 = math.sqrt %4 : vector<16x1xf32>
    %cst_3 = arith.constant 9.99999996E-13 : f32
    %6 = vector.broadcast %cst_3 : f32 to vector<16x1xf32>
    %7 = arith.maximumf %5, %6 : vector<16x1xf32>
    %8 = vector.broadcast %7 : vector<16x1xf32> to vector<16x64xf32>
    %9 = arith.divf %0, %8 : vector<16x64xf32>
    %cst_4 = arith.constant 8.000000e+00 : f32
    %10 = vector.broadcast %cst_4 : f32 to vector<16x64xf32>
    %11 = arith.mulf %9, %10 : vector<16x64xf32>
    %12 = vector.broadcast %1 : vector<1x64xf32> to vector<16x64xf32>
    %13 = arith.mulf %11, %12 : vector<16x64xf32>
    %c0_5 = arith.constant 0 : index
    %c0_6 = arith.constant 0 : index
    %14 = vector.load %arg3[%c0_5, %c0_6] : memref<64x64xf32, #tpu.memory_space<vmem>>, vector<64x64xf32>
    %cst_7 = arith.constant dense<0.000000e+00> : vector<16x64xf32>
    %15 = tpu.matmul %13, %14, %cst_7 {dimension_numbers = #tpu.dot_dimension_numbers<[1], [0], [0], [1], [0, 0, 1, 1], [], []>} : vector<16x64xf32>, vector<64x64xf32>, vector<16x64xf32> -> vector<16x64xf32>
    %c0_8 = arith.constant 0 : index
    %c0_9 = arith.constant 0 : index
    %16 = vector.load %arg6[%c0_8, %c0_9] : memref<16x64xf32, #tpu.memory_space<vmem>>, vector<16x64xf32>
    tpu.vector_store %arg6[%c0_8, %c0_9], %15 {strides = array<i32>} : memref<16x64xf32, #tpu.memory_space<vmem>>, vector<16x64xf32>,
    %c0_10 = arith.constant 0 : index
    %c0_11 = arith.constant 0 : index
    %17 = vector.load %arg4[%c0_10, %c0_11] : memref<64x64xf32, #tpu.memory_space<vmem>>, vector<64x64xf32>
    %cst_12 = arith.constant dense<0.000000e+00> : vector<16x64xf32>
    %18 = tpu.matmul %13, %17, %cst_12 {dimension_numbers = #tpu.dot_dimension_numbers<[1], [0], [0], [1], [0, 0, 1, 1], [], []>} : vector<16x64xf32>, vector<64x64xf32>, vector<16x64xf32> -> vector<16x64xf32>
    %c0_13 = arith.constant 0 : index
    %c0_14 = arith.constant 0 : index
    %19 = vector.load %arg7[%c0_13, %c0_14] : memref<16x64xf32, #tpu.memory_space<vmem>>, vector<16x64xf32>
    tpu.vector_store %arg7[%c0_13, %c0_14], %18 {strides = array<i32>} : memref<16x64xf32, #tpu.memory_space<vmem>>, vector<16x64xf32>,
    %c0_15 = arith.constant 0 : index
    %c0_16 = arith.constant 0 : index
    %20 = vector.load %arg5[%c0_15, %c0_16] : memref<64x64xf32, #tpu.memory_space<vmem>>, vector<64x64xf32>
    %cst_17 = arith.constant dense<0.000000e+00> : vector<16x64xf32>
    %21 = tpu.matmul %13, %20, %cst_17 {dimension_numbers = #tpu.dot_dimension_numbers<[1], [0], [0], [1], [0, 0, 1, 1], [], []>} : vector<16x64xf32>, vector<64x64xf32>, vector<16x64xf32> -> vector<16x64xf32>
    %c0_18 = arith.constant 0 : index
    %c0_19 = arith.constant 0 : index
    %22 = vector.load %arg8[%c0_18, %c0_19] : memref<16x64xf32, #tpu.memory_space<vmem>>, vector<16x64xf32>
    tpu.vector_store %arg8[%c0_18, %c0_19], %21 {strides = array<i32>} : memref<16x64xf32, #tpu.memory_space<vmem>>, vector<16x64xf32>,
    return
  }
  func.func @transform_0(%arg0: i32) -> (i32, i32) {
    %c0_i32 = arith.constant 0 : i32
    %c0_i32_0 = arith.constant 0 : i32
    return %arg0, %c0_i32 : i32, i32
  }
  func.func @transform_1(%arg0: i32) -> (i32, i32) {
    %c0_i32 = arith.constant 0 : i32
    %c0_i32_0 = arith.constant 0 : i32
    %c0_i32_1 = arith.constant 0 : i32
    return %c0_i32, %c0_i32_0 : i32, i32
  }
  func.func @transform_2(%arg0: i32) -> (i32, i32) {
    %c0_i32 = arith.constant 0 : i32
    %c0_i32_0 = arith.constant 0 : i32
    %c0_i32_1 = arith.constant 0 : i32
    return %c0_i32, %c0_i32_0 : i32, i32
  }
  func.func @transform_3(%arg0: i32) -> (i32, i32) {
    %c0_i32 = arith.constant 0 : i32
    %c0_i32_0 = arith.constant 0 : i32
    %c0_i32_1 = arith.constant 0 : i32
    return %c0_i32, %c0_i32_0 : i32, i32
  }
  func.func @transform_4(%arg0: i32) -> (i32, i32) {
    %c0_i32 = arith.constant 0 : i32
    %c0_i32_0 = arith.constant 0 : i32
    %c0_i32_1 = arith.constant 0 : i32
    return %c0_i32, %c0_i32_0 : i32, i32
  }
  func.func @transform_5(%arg0: i32) -> (i32, i32) {
    %c0_i32 = arith.constant 0 : i32
    %c0_i32_0 = arith.constant 0 : i32
    return %arg0, %c0_i32 : i32, i32
  }
  func.func @transform_6(%arg0: i32) -> (i32, i32) {
    %c0_i32 = arith.constant 0 : i32
    %c0_i32_0 = arith.constant 0 : i32
    return %arg0, %c0_i32 : i32, i32
  }
  func.func @transform_7(%arg0: i32) -> (i32, i32) {
    %c0_i32 = arith.constant 0 : i32
    %c0_i32_0 = arith.constant 0 : i32
    return %arg0, %c0_i32 : i32, i32
  }
}

</mosaic_0001>

<llo_original>
// kernel: tpu_custom_call.1
$region0: #{tpu_custom_call.1}
  #allocation0 [shape = 'u32[]', space=smem, size = 0x4, offset = 0x4, fixed_abs, tag = 'smem constant byte address 0x4 - core index']
  #allocation1 [shape = 'u32[144,128]{1,0:T(1,128)}', space=vmem, size = 0x12000, scoped, tag = 'internal scratch']
  %s0 = inlined_call_operand.hbm [shape: f32[16,64], index: 0, kind: input, shape index: {}]
  %s1 = inlined_call_operand.vmem [shape: f32[1,64], index: 1, kind: input, shape index: {}]
  %s2 = inlined_call_operand.hbm [shape: f32[64,64], index: 2, kind: input, shape index: {}]
  %s3 = inlined_call_operand.hbm [shape: f32[64,64], index: 3, kind: input, shape index: {}]
  %s4 = inlined_call_operand.hbm [shape: f32[64,64], index: 4, kind: input, shape index: {}]
  %s5 = inlined_call_operand.hbm [shape: f32[16,64], index: 5, kind: output, shape index: {0}]
  %s6 = inlined_call_operand.hbm [shape: f32[16,64], index: 6, kind: output, shape index: {1}]
  %s7 = inlined_call_operand.hbm [shape: f32[16,64], index: 7, kind: output, shape index: {2}]
  %8 = xla_tuple %s5, %s6, %s7
  %s9 = sld [smem:[#allocation0]]
  $region62: #{tpu_custom_call.1} parent=0
    _
  %s11 = ssub.s32 1, %s9
  %s12 = scalar_select 0, %s11, %s9
  $region1: #{tpu_custom_call.1} parent=0
    #allocation2 [shape = 'u8[8192]{0}', space=vmem, size = 0x2000, scoped, tag = 'input window, operand 0, single buffered']
    #allocation3 [shape = 's32[1]{0}', space=sflag, size = 0x4, scoped, tag = 'scoped memory for tpu_custom_call.1']
    #allocation4 [shape = 's32[1]{0}', space=sflag, size = 0x4, scoped, tag = 'scoped memory for tpu_custom_call.1']
    #allocation5 [shape = 'u8[32768]{0}', space=vmem, size = 0x8000, scoped, tag = 'input window, operand 2, single buffered']
    #allocation6 [shape = 's32[1]{0}', space=sflag, size = 0x4, scoped, tag = 'scoped memory for tpu_custom_call.1']
    #allocation7 [shape = 'u8[32768]{0}', space=vmem, size = 0x8000, scoped, tag = 'input window, operand 3, single buffered']
    #allocation8 [shape = 'u8[32768]{0}', space=vmem, size = 0x8000, scoped, tag = 'input window, operand 4, single buffered']
    #allocation9 [shape = 's32[1]{0}', space=sflag, size = 0x4, scoped, tag = 'scoped memory for tpu_custom_call.1']
    #allocation10 [shape = 'u8[8192]{0}', space=vmem, size = 0x2000, scoped, tag = 'output window, operand 0, single buffered']
    #allocation11 [shape = 'u8[8192]{0}', space=vmem, size = 0x2000, scoped, tag = 'output window, operand 1, single buffered']
    #allocation12 [shape = 's32[1]{0}', space=sflag, size = 0x4, scoped, tag = 'scoped memory for tpu_custom_call.1']
    #allocation13 [shape = 'u8[8192]{0}', space=vmem, size = 0x2000, scoped, tag = 'output window, operand 2, single buffered']
    %13 = vsyncpa [#allocation3], 0
    %14 = vsyncpa [#allocation6], 0
    %15 = vsyncpa [#allocation9], 0
    %16 = vsyncpa [#allocation4], 0
    %17 = vsyncpa [#allocation12], 0
    // Predicated region
    $region2: #{tpu_custom_call.1} parent=1 // pred_check
      _
    $region3: #{tpu_custom_call.1} parent=1 // pred_check_branch
      %19 = sbr.rel (0) target = $region5
    $region4: #{tpu_custom_call.1} parent=1 // pred_region
      %s21 = ssub.s32 256, 256
      %22 = vsyncadd [#allocation3], %s21
      %s23 = sshll.u32 [#allocation2], 4
      %s24 = int_to_ptr.vmem [resolvable:$true] %s23
      %29 = dma.hbm_to_vmem [thread:$0]  %s0, 256, %s24, [#allocation3], 128, 128, 8
    $region5: #{tpu_custom_call.1} parent=1 // pred_fallthru
      _
    // Predicated region
    $region6: #{tpu_custom_call.1} parent=1 // pred_check
      _
    $region7: #{tpu_custom_call.1} parent=1 // pred_check_branch
      %31 = sbr.rel (0) target = $region9
    $region8: #{tpu_custom_call.1} parent=1 // pred_region
      _
    $region9: #{tpu_custom_call.1} parent=1 // pred_fallthru
      _
    // Predicated region
    $region10: #{tpu_custom_call.1} parent=1 // pred_check
      _
    $region11: #{tpu_custom_call.1} parent=1 // pred_check_branch
      %33 = sbr.rel (0) target = $region13
    $region12: #{tpu_custom_call.1} parent=1 // pred_region
      %s35 = ssub.s32 1024, 1024
      %36 = vsyncadd [#allocation6], %s35
      %s37 = sshll.u32 [#allocation5], 4
      %s38 = int_to_ptr.vmem [resolvable:$true] %s37
      %43 = dma.hbm_to_vmem [thread:$0]  %s2, 1024, %s38, [#allocation6], 128, 128, 8
    $region13: #{tpu_custom_call.1} parent=1 // pred_fallthru
      _
    // Predicated region
    $region14: #{tpu_custom_call.1} parent=1 // pred_check
      _
    $region15: #{tpu_custom_call.1} parent=1 // pred_check_branch
      %45 = sbr.rel (0) target = $region17
    $region16: #{tpu_custom_call.1} parent=1 // pred_region
      %s47 = ssub.s32 1024, 1024
      %48 = vsyncadd [#allocation6], %s47
      %s49 = sshll.u32 [#allocation7], 4
      %s50 = int_to_ptr.vmem [resolvable:$true] %s49
      %55 = dma.hbm_to_vmem [thread:$0]  %s3, 1024, %s50, [#allocation6], 128, 128, 8
    $region17: #{tpu_custom_call.1} parent=1 // pred_fallthru
      _
    // Predicated region
    $region18: #{tpu_custom_call.1} parent=1 // pred_check
      _
    $region19: #{tpu_custom_call.1} parent=1 // pred_check_branch
      %57 = sbr.rel (0) target = $region21
    $region20: #{tpu_custom_call.1} parent=1 // pred_region
      %s59 = ssub.s32 1024, 1024
      %60 = vsyncadd [#allocation9], %s59
      %s61 = sshll.u32 [#allocation8], 4
      %s62 = int_to_ptr.vmem [resolvable:$true] %s61
      %67 = dma.hbm_to_vmem [thread:$0]  %s4, 1024, %s62, [#allocation9], 128, 128, 8
    $region21: #{tpu_custom_call.1} parent=1 // pred_fallthru
      _
    // Predicated region
    $region22: #{tpu_custom_call.1} parent=1 // pred_check
      _
    $region23: #{tpu_custom_call.1} parent=1 // pred_check_branch
      %69 = sbr.rel (0) target = $region25
    $region24: #{tpu_custom_call.1} parent=1 // pred_region
      %70 = dma.done [#allocation3], 256
    $region25: #{tpu_custom_call.1} parent=1 // pred_fallthru
      _
    // Predicated region
    $region26: #{tpu_custom_call.1} parent=1 // pred_check
      _
    $region27: #{tpu_custom_call.1} parent=1 // pred_check_branch
      %72 = sbr.rel (0) target = $region29
    $region28: #{tpu_custom_call.1} parent=1 // pred_region
      %73 = dma.done [#allocation6], 1024
    $region29: #{tpu_custom_call.1} parent=1 // pred_fallthru
      _
    // Predicated region
    $region30: #{tpu_custom_call.1} parent=1 // pred_check
      _
    $region31: #{tpu_custom_call.1} parent=1 // pred_check_branch
      %75 = sbr.rel (0) target = $region33
    $region32: #{tpu_custom_call.1} parent=1 // pred_region
      %76 = dma.done [#allocation6], 1024
    $region33: #{tpu_custom_call.1} parent=1 // pred_fallthru
      _
    // Predicated region
    $region34: #{tpu_custom_call.1} parent=1 // pred_check
      _
    $region35: #{tpu_custom_call.1} parent=1 // pred_check_branch
      %78 = sbr.rel (0) target = $region37
    $region36: #{tpu_custom_call.1} parent=1 // pred_region
      %79 = dma.done [#allocation9], 1024
    $region37: #{tpu_custom_call.1} parent=1 // pred_fallthru
      _
    %v80 = vld [vmem:[#allocation2] sm:$0xff]
    %v81 = vld [vmem:[#allocation2 + $0x8] sm:$0xff]
    %v82 = vld [vmem:[%s1] sm:$0x1]
    %v83 = vmul.f32 %v80, %v80
    %v84 = vmul.f32 %v81, %v81
    %vm85 = vcmask 523264
    %v86 = vsel %vm85, %v83, 0.0
    %87 = vadd.xlane.f32.xlu0 %v86
    %v88 = vpop.xlane.xlu0 %87
    %v89 = vsel %vm85, %v84, 0.0
    %90 = vadd.xlane.f32.xlu0 %v89
    %v91 = vpop.xlane.xlu0 %90
    %v92 = vrsqrt.pop %v88
    %v93 = vmul.f32 %v88, %v92
    %vm94 = vcmp.eq.f32.partialorder %v88, inf
    %v95 = vsel %vm94, %v88, %v93
    %vm96 = vcmp.eq.f32.partialorder %v88, 0.0
    %v97 = vand.u32 %v88, 2147483648
    %v98 = vsel %vm96, %v97, %v95
    %v99 = vrsqrt.pop %v91
    %v100 = vmul.f32 %v91, %v99
    %vm101 = vcmp.eq.f32.partialorder %v91, inf
    %v102 = vsel %vm101, %v91, %v100
    %vm103 = vcmp.eq.f32.partialorder %v91, 0.0
    %v104 = vand.u32 %v91, 2147483648
    %v105 = vsel %vm103, %v104, %v102
    %v106 = vmax.f32 %v98, 1e-12
    %v107 = vmax.f32 %v105, 1e-12
    %v108 = vrcp.pop %v106
    %v109 = vmul.f32 %v80, %v108
    %v110 = vrcp.pop %v107
    %v111 = vmul.f32 %v81, %v110
    %v112 = vmul.f32 %v109, 8.0
    %v113 = vmul.f32 %v111, 8.0
    %v115 = vlaneseq
    %v116 = vshrl.u32 %v115, 7
    %v117 = vsub.s32 0, %v116
    %v118 = vrot.slane %v82, %v117
    %v120 = vmul.f32 %v112, %v118
    %v121 = vmul.f32 %v113, %v118
    %v122 = vld [vmem:[#allocation5] sm:$0xff]
    %v123 = vld [vmem:[#allocation5 + $0x8] sm:$0xff]
    %v124 = vld [vmem:[#allocation5 + $0x10] sm:$0xff]
    %v125 = vld [vmem:[#allocation5 + $0x18] sm:$0xff]
    %v126 = vld [vmem:[#allocation5 + $0x20] sm:$0xff]
    %v127 = vld [vmem:[#allocation5 + $0x28] sm:$0xff]
    %v128 = vld [vmem:[#allocation5 + $0x30] sm:$0xff]
    %v129 = vld [vmem:[#allocation5 + $0x38] sm:$0xff]
    %v131 = vsel %vm85, %v120, 0
    %v134 = vsel %vm85, %v121, 0
    %136 = vmatprep.subr.mxu0 0.0
    %137 = vmatpush1.msra.mxu0 0.0
    %138 = vmatprep.subr.mxu0 0.0
    %139 = vmatpush1.msra.mxu0 0.0
    %140 = vmatprep.subr.mxu0 0.0
    %141 = vmatpush1.msra.mxu0 0.0
    %142 = vmatprep.subr.mxu0 0.0
    %143 = vmatpush1.msra.mxu0 0.0
    %144 = vmatprep.subr.mxu0 0.0
    %145 = vmatpush1.msra.mxu0 0.0
    %146 = vmatprep.subr.mxu0 0.0
    %147 = vmatpush1.msra.mxu0 0.0
    %148 = vmatprep.subr.mxu0 0.0
    %149 = vmatpush1.msra.mxu0 0.0
    %150 = vmatprep.subr.mxu0 0.0
    %151 = vmatpush1.msra.mxu0 0.0
    %152 = vmatprep.subr.mxu0 0.0
    %153 = vmatpush1.msra.mxu0 %v129
    %154 = vmatprep.subr.mxu0 0.0
    %155 = vmatpush1.msra.mxu0 %v128
    %156 = vmatprep.subr.mxu0 0.0
    %157 = vmatpush1.msra.mxu0 %v127
    %158 = vmatprep.subr.mxu0 0.0
    %159 = vmatpush1.msra.mxu0 %v126
    %160 = vmatprep.subr.mxu0 0.0
    %161 = vmatpush1.msra.mxu0 %v125
    %162 = vmatprep.subr.mxu0 0.0
    %163 = vmatpush1.msra.mxu0 %v124
    %164 = vmatprep.subr.mxu0 0.0
    %165 = vmatpush1.msra.mxu0 %v123
    %166 = vmatprep.subr.mxu0 0.0
    %167 = vmatpush1.msra.mxu0 %v122
    %168 = vmatprep.subr.mxu0 0.0
    %169 = vmatpush2.msra.mxu0 0.0
    %170 = vmatprep.subr.mxu0 0.0
    %171 = vmatpush2.msra.mxu0 0.0
    %172 = vmatprep.subr.mxu0 0.0
    %173 = vmatpush2.msra.mxu0 0.0
    %174 = vmatprep.subr.mxu0 0.0
    %175 = vmatpush2.msra.mxu0 0.0
    %176 = vmatprep.subr.mxu0 0.0
    %177 = vmatpush2.msra.mxu0 0.0
    %178 = vmatprep.subr.mxu0 0.0
    %179 = vmatpush2.msra.mxu0 0.0
    %180 = vmatprep.subr.mxu0 0.0
    %181 = vmatpush2.msra.mxu0 0.0
    %182 = vmatprep.subr.mxu0 0.0
    %183 = vmatpush2.msra.mxu0 0.0
    %184 = vmatprep.subr.mxu0 0.0
    %185 = vmatpush2.msra.mxu0 0.0
    %186 = vmatprep.subr.mxu0 0.0
    %187 = vmatpush2.msra.mxu0 0.0
    %188 = vmatprep.subr.mxu0 0.0
    %189 = vmatpush2.msra.mxu0 0.0
    %190 = vmatprep.subr.mxu0 0.0
    %191 = vmatpush2.msra.mxu0 0.0
    %192 = vmatprep.subr.mxu0 0.0
    %193 = vmatpush2.msra.mxu0 0.0
    %194 = vmatprep.subr.mxu0 0.0
    %195 = vmatpush2.msra.mxu0 0.0
    %196 = vmatprep.subr.mxu0 0.0
    %197 = vmatpush2.msra.mxu0 0.0
    %198 = vmatprep.subr.mxu0 0.0
    %199 = vmatpush2.msra.mxu0 0.0
    %200 = vmatprep.mubr.f32.mxu0 0.0
    %201 = vmatmul.mubr.f32.gmra.mxu0 %v131
    %v202 = vpop.f32.mrf.mxu0
    %v203 = vadd.f32 0.0, %v202
    %v204 = vpop.f32.mrf.mxu0
    %205 = vmatprep.mubr.f32.mxu0 0.0
    %206 = vmatmul.mubr.f32.gmra.mxu0 %v134
    %v207 = vpop.f32.mrf.mxu0
    %v208 = vadd.f32 0.0, %v207
    %v209 = vpop.f32.mrf.mxu0
    %210 = vdwg.mxu0
    %211 = vst.msk [vmem:[#allocation10] sm:$0xff] %vm85, %v203
    %212 = vst.msk [vmem:[#allocation10 + $0x8] sm:$0xff] %vm85, %v208
    %v213 = vld [vmem:[#allocation7] sm:$0xff]
    %v214 = vld [vmem:[#allocation7 + $0x8] sm:$0xff]
    %v215 = vld [vmem:[#allocation7 + $0x10] sm:$0xff]
    %v216 = vld [vmem:[#allocation7 + $0x18] sm:$0xff]
    %v217 = vld [vmem:[#allocation7 + $0x20] sm:$0xff]
    %v218 = vld [vmem:[#allocation7 + $0x28] sm:$0xff]
    %v219 = vld [vmem:[#allocation7 + $0x30] sm:$0xff]
    %v220 = vld [vmem:[#allocation7 + $0x38] sm:$0xff]
    %221 = vmatprep.subr.mxu0 0.0
    %222 = vmatpush1.msra.mxu0 0.0
    %223 = vmatprep.subr.mxu0 0.0
    %224 = vmatpush1.msra.mxu0 0.0
    %225 = vmatprep.subr.mxu0 0.0
    %226 = vmatpush1.msra.mxu0 0.0
    %227 = vmatprep.subr.mxu0 0.0
    %228 = vmatpush1.msra.mxu0 0.0
    %229 = vmatprep.subr.mxu0 0.0
    %230 = vmatpush1.msra.mxu0 0.0
    %231 = vmatprep.subr.mxu0 0.0
    %232 = vmatpush1.msra.mxu0 0.0
    %233 = vmatprep.subr.mxu0 0.0
    %234 = vmatpush1.msra.mxu0 0.0
    %235 = vmatprep.subr.mxu0 0.0
    %236 = vmatpush1.msra.mxu0 0.0
    %237 = vmatprep.subr.mxu0 0.0
    %238 = vmatpush1.msra.mxu0 %v220
    %239 = vmatprep.subr.mxu0 0.0
    %240 = vmatpush1.msra.mxu0 %v219
    %241 = vmatprep.subr.mxu0 0.0
    %242 = vmatpush1.msra.mxu0 %v218
    %243 = vmatprep.subr.mxu0 0.0
    %244 = vmatpush1.msra.mxu0 %v217
    %245 = vmatprep.subr.mxu0 0.0
    %246 = vmatpush1.msra.mxu0 %v216
    %247 = vmatprep.subr.mxu0 0.0
    %248 = vmatpush1.msra.mxu0 %v215
    %249 = vmatprep.subr.mxu0 0.0
    %250 = vmatpush1.msra.mxu0 %v214
    %251 = vmatprep.subr.mxu0 0.0
    %252 = vmatpush1.msra.mxu0 %v213
    %253 = vmatprep.subr.mxu0 0.0
    %254 = vmatpush2.msra.mxu0 0.0
    %255 = vmatprep.subr.mxu0 0.0
    %256 = vmatpush2.msra.mxu0 0.0
    %257 = vmatprep.subr.mxu0 0.0
    %258 = vmatpush2.msra.mxu0 0.0
    %259 = vmatprep.subr.mxu0 0.0
    %260 = vmatpush2.msra.mxu0 0.0
    %261 = vmatprep.subr.mxu0 0.0
    %262 = vmatpush2.msra.mxu0 0.0
    %263 = vmatprep.subr.mxu0 0.0
    %264 = vmatpush2.msra.mxu0 0.0
    %265 = vmatprep.subr.mxu0 0.0
    %266 = vmatpush2.msra.mxu0 0.0
    %267 = vmatprep.subr.mxu0 0.0
    %268 = vmatpush2.msra.mxu0 0.0
    %269 = vmatprep.subr.mxu0 0.0
    %270 = vmatpush2.msra.mxu0 0.0
    %271 = vmatprep.subr.mxu0 0.0
    %272 = vmatpush2.msra.mxu0 0.0
    %273 = vmatprep.subr.mxu0 0.0
    %274 = vmatpush2.msra.mxu0 0.0
    %275 = vmatprep.subr.mxu0 0.0
    %276 = vmatpush2.msra.mxu0 0.0
    %277 = vmatprep.subr.mxu0 0.0
    %278 = vmatpush2.msra.mxu0 0.0
    %279 = vmatprep.subr.mxu0 0.0
    %280 = vmatpush2.msra.mxu0 0.0
    %281 = vmatprep.subr.mxu0 0.0
    %282 = vmatpush2.msra.mxu0 0.0
    %283 = vmatprep.subr.mxu0 0.0
    %284 = vmatpush2.msra.mxu0 0.0
    %285 = vmatprep.mubr.f32.mxu0 0.0
    %286 = vmatmul.mubr.f32.gmra.mxu0 %v131
    %v287 = vpop.f32.mrf.mxu0
    %v288 = vadd.f32 0.0, %v287
    %v289 = vpop.f32.mrf.mxu0
    %290 = vmatprep.mubr.f32.mxu0 0.0
    %291 = vmatmul.mubr.f32.gmra.mxu0 %v134
    %v292 = vpop.f32.mrf.mxu0
    %v293 = vadd.f32 0.0, %v292
    %v294 = vpop.f32.mrf.mxu0
    %295 = vdwg.mxu0
    %296 = vst.msk [vmem:[#allocation11] sm:$0xff] %vm85, %v288
    %297 = vst.msk [vmem:[#allocation11 + $0x8] sm:$0xff] %vm85, %v293
    %v298 = vld [vmem:[#allocation8] sm:$0xff]
    %v299 = vld [vmem:[#allocation8 + $0x8] sm:$0xff]
    %v300 = vld [vmem:[#allocation8 + $0x10] sm:$0xff]
    %v301 = vld [vmem:[#allocation8 + $0x18] sm:$0xff]
    %v302 = vld [vmem:[#allocation8 + $0x20] sm:$0xff]
    %v303 = vld [vmem:[#allocation8 + $0x28] sm:$0xff]
    %v304 = vld [vmem:[#allocation8 + $0x30] sm:$0xff]
    %v305 = vld [vmem:[#allocation8 + $0x38] sm:$0xff]
    %306 = vmatprep.subr.mxu0 0.0
    %307 = vmatpush1.msra.mxu0 0.0
    %308 = vmatprep.subr.mxu0 0.0
    %309 = vmatpush1.msra.mxu0 0.0
    %310 = vmatprep.subr.mxu0 0.0
    %311 = vmatpush1.msra.mxu0 0.0
    %312 = vmatprep.subr.mxu0 0.0
    %313 = vmatpush1.msra.mxu0 0.0
    %314 = vmatprep.subr.mxu0 0.0
    %315 = vmatpush1.msra.mxu0 0.0
    %316 = vmatprep.subr.mxu0 0.0
    %317 = vmatpush1.msra.mxu0 0.0
    %318 = vmatprep.subr.mxu0 0.0
    %319 = vmatpush1.msra.mxu0 0.0
    %320 = vmatprep.subr.mxu0 0.0
    %321 = vmatpush1.msra.mxu0 0.0
    %322 = vmatprep.subr.mxu0 0.0
    %323 = vmatpush1.msra.mxu0 %v305
    %324 = vmatprep.subr.mxu0 0.0
    %325 = vmatpush1.msra.mxu0 %v304
    %326 = vmatprep.subr.mxu0 0.0
    %327 = vmatpush1.msra.mxu0 %v303
    %328 = vmatprep.subr.mxu0 0.0
    %329 = vmatpush1.msra.mxu0 %v302
    %330 = vmatprep.subr.mxu0 0.0
    %331 = vmatpush1.msra.mxu0 %v301
    %332 = vmatprep.subr.mxu0 0.0
    %333 = vmatpush1.msra.mxu0 %v300
    %334 = vmatprep.subr.mxu0 0.0
    %335 = vmatpush1.msra.mxu0 %v299
    %336 = vmatprep.subr.mxu0 0.0
    %337 = vmatpush1.msra.mxu0 %v298
    %338 = vmatprep.subr.mxu0 0.0
    %339 = vmatpush2.msra.mxu0 0.0
    %340 = vmatprep.subr.mxu0 0.0
    %341 = vmatpush2.msra.mxu0 0.0
    %342 = vmatprep.subr.mxu0 0.0
    %343 = vmatpush2.msra.mxu0 0.0
    %344 = vmatprep.subr.mxu0 0.0
    %345 = vmatpush2.msra.mxu0 0.0
    %346 = vmatprep.subr.mxu0 0.0
    %347 = vmatpush2.msra.mxu0 0.0
    %348 = vmatprep.subr.mxu0 0.0
    %349 = vmatpush2.msra.mxu0 0.0
    %350 = vmatprep.subr.mxu0 0.0
    %351 = vmatpush2.msra.mxu0 0.0
    %352 = vmatprep.subr.mxu0 0.0
    %353 = vmatpush2.msra.mxu0 0.0
    %354 = vmatprep.subr.mxu0 0.0
    %355 = vmatpush2.msra.mxu0 0.0
    %356 = vmatprep.subr.mxu0 0.0
    %357 = vmatpush2.msra.mxu0 0.0
    %358 = vmatprep.subr.mxu0 0.0
    %359 = vmatpush2.msra.mxu0 0.0
    %360 = vmatprep.subr.mxu0 0.0
    %361 = vmatpush2.msra.mxu0 0.0
    %362 = vmatprep.subr.mxu0 0.0
    %363 = vmatpush2.msra.mxu0 0.0
    %364 = vmatprep.subr.mxu0 0.0
    %365 = vmatpush2.msra.mxu0 0.0
    %366 = vmatprep.subr.mxu0 0.0
    %367 = vmatpush2.msra.mxu0 0.0
    %368 = vmatprep.subr.mxu0 0.0
    %369 = vmatpush2.msra.mxu0 0.0
    %370 = vmatprep.mubr.f32.mxu0 0.0
    %371 = vmatmul.mubr.f32.gmra.mxu0 %v131
    %v372 = vpop.f32.mrf.mxu0
    %v373 = vadd.f32 0.0, %v372
    %v374 = vpop.f32.mrf.mxu0
    %375 = vmatprep.mubr.f32.mxu0 0.0
    %376 = vmatmul.mubr.f32.gmra.mxu0 %v134
    %v377 = vpop.f32.mrf.mxu0
    %v378 = vadd.f32 0.0, %v377
    %v379 = vpop.f32.mrf.mxu0
    %380 = vdwg.mxu0
    %381 = vst.msk [vmem:[#allocation13] sm:$0xff] %vm85, %v373
    %382 = vst.msk [vmem:[#allocation13 + $0x8] sm:$0xff] %vm85, %v378
    // Predicated region
    $region38: #{tpu_custom_call.1} parent=1 // pred_check
      _
    $region39: #{tpu_custom_call.1} parent=1 // pred_check_branch
      %384 = sbr.rel (0) target = $region41
    $region40: #{tpu_custom_call.1} parent=1 // pred_region
      %s386 = ssub.s32 256, 256
      %387 = vsyncadd [#allocation4], %s386
      %s388 = sshll.u32 [#allocation10], 4
      %s389 = int_to_ptr.vmem [resolvable:$true] %s388
      %394 = dma.vmem_to_hbm [thread:$0]  %s389, 256, %s5, [#allocation4], 128, 128, 8
    $region41: #{tpu_custom_call.1} parent=1 // pred_fallthru
      _
    // Predicated region
    $region42: #{tpu_custom_call.1} parent=1 // pred_check
      _
    $region43: #{tpu_custom_call.1} parent=1 // pred_check_branch
      %396 = sbr.rel (0) target = $region45
    $region44: #{tpu_custom_call.1} parent=1 // pred_region
      %s398 = ssub.s32 256, 256
      %399 = vsyncadd [#allocation12], %s398
      %s400 = sshll.u32 [#allocation11], 4
      %s401 = int_to_ptr.vmem [resolvable:$true] %s400
      %406 = dma.vmem_to_hbm [thread:$0]  %s401, 256, %s6, [#allocation12], 128, 128, 8
    $region45: #{tpu_custom_call.1} parent=1 // pred_fallthru
      _
    // Predicated region
    $region46: #{tpu_custom_call.1} parent=1 // pred_check
      _
    $region47: #{tpu_custom_call.1} parent=1 // pred_check_branch
      %408 = sbr.rel (0) target = $region49
    $region48: #{tpu_custom_call.1} parent=1 // pred_region
      %s410 = ssub.s32 256, 256
      %411 = vsyncadd [#allocation12], %s410
      %s412 = sshll.u32 [#allocation13], 4
      %s413 = int_to_ptr.vmem [resolvable:$true] %s412
      %418 = dma.vmem_to_hbm [thread:$0]  %s413, 256, %s7, [#allocation12], 128, 128, 8
    $region49: #{tpu_custom_call.1} parent=1 // pred_fallthru
      _
    // Predicated region
    $region50: #{tpu_custom_call.1} parent=1 // pred_check
      _
    $region51: #{tpu_custom_call.1} parent=1 // pred_check_branch
      %420 = sbr.rel (0) target = $region53
    $region52: #{tpu_custom_call.1} parent=1 // pred_region
      %421 = dma.done [#allocation4], 256
    $region53: #{tpu_custom_call.1} parent=1 // pred_fallthru
      _
    // Predicated region
    $region54: #{tpu_custom_call.1} parent=1 // pred_check
      _
    $region55: #{tpu_custom_call.1} parent=1 // pred_check_branch
      %423 = sbr.rel (0) target = $region57
    $region56: #{tpu_custom_call.1} parent=1 // pred_region
      %424 = dma.done [#allocation12], 256
    $region57: #{tpu_custom_call.1} parent=1 // pred_fallthru
      _
    // Predicated region
    $region58: #{tpu_custom_call.1} parent=1 // pred_check
      _
    $region59: #{tpu_custom_call.1} parent=1 // pred_check_branch
      %426 = sbr.rel (0) target = $region61
    $region60: #{tpu_custom_call.1} parent=1 // pred_region
      %427 = dma.done [#allocation12], 256
    $region61: #{tpu_custom_call.1} parent=1 // pred_fallthru
      _
    %428 = vsyncpa [#allocation3], 1
    %429 = vsyncpa [#allocation6], 1
    %430 = vsyncpa [#allocation9], 1
    %431 = vsyncpa [#allocation4], 1
    %432 = vsyncpa [#allocation12], 1

</llo_original>
